<compile_context>
chip_gen: v6e
topology: v6e:2x2x1
jax: 0.10.0
libtpu: 0.0.40
codegen_flags: <defaults>
</compile_context>

<pallas_src>
import functools

import jax
import jax.numpy as jnp
from jax.experimental import pallas as pl
from jax.experimental.pallas import tpu as pltpu


# ----------------------------------------------------------------------------
# Pallas kernel: NeuralSort permutation + partition matmul + Plackett-Luce logp
# One batch element per grid step; all in-kernel math is 2-D (N, N) tiles.
# ----------------------------------------------------------------------------
def _make_partition_kernel(tau: float, hard: bool):
    inv_tau = 1.0 / float(tau)

    def kernel(pert_ref, clean_ref, f_ref, perm_ref, part_ref, logp_ref):
        # pert_ref : (1, 1, N)   Gumbel-perturbed log scores (row layout)
        # clean_ref: (1, 1, N)   un-noised log scores (for the PL log-prob)
        # f_ref    : (1, K, N)   shifted filled one-hots
        f32 = jnp.float32
        s = pert_ref[0]                                   # (1, N)
        N = s.shape[-1]

        # Batch-independent index constants (built once per step, 2-D only).
        row_i = jax.lax.broadcasted_iota(jnp.int32, (N, N), 0)   # sublane (row) idx
        col_j = jax.lax.broadcasted_iota(jnp.int32, (N, N), 1)   # lane (col) idx

        # Column broadcast col[i, j] = s[i] without an explicit transpose:
        # diag(s) @ ones rides the otherwise-idle MXU (1 small matmul / step).
        row = jnp.broadcast_to(s, (N, N))                        # row[i, j] = s[j]
        eye = (row_i == col_j).astype(f32)
        col = jnp.dot(row * eye, jnp.ones((N, N), f32),
                      preferred_element_type=f32)                # col[i, j] = s[i]

        # --- NeuralSort relaxed/hard permutation ----------------------------
        A = jnp.abs(col - row)                                   # |s_i - s_j|
        bsum = jnp.sum(A, axis=0, keepdims=True)                 # (1, N): sum_i |s_i - s_j|
        scaling = (float(N) - 1.0) - 2.0 * row_i.astype(f32)     # N + 1 - 2*(i+1)
        logits = (scaling * row - bsum) * inv_tau                # (N, N)
        row_max = jnp.max(logits, axis=-1, keepdims=True)        # (N, 1)

        if hard:
            # Hard permutation: per-row argmax (first max wins), one-hot.
            # TODO(synk): training would use a straight-through estimator
            # (hard + soft - stop_grad(soft)); forward values are identical.
            cand = jnp.where(logits >= row_max, col_j, jnp.int32(N))
            amin = jnp.min(cand, axis=-1, keepdims=True)         # (N, 1)
            perm = (col_j == amin).astype(f32)
        else:
            e = jnp.exp(logits - row_max)
            perm = e / jnp.sum(e, axis=-1, keepdims=True)

        perm_ref[0] = perm

        # --- partition = clip(filled_ohts @ permutation, 0, 1) --------------
        part = jnp.dot(f_ref[0], perm, preferred_element_type=f32)   # (K, N)
        part_ref[0] = jnp.clip(part, 0.0, 1.0)

        # --- Plackett-Luce log prob of `perm` under the clean log scores ----
        # sorted_s[i] = sum_j perm[i, j] * c[j]   (VPU multiply + lane reduce)
        c_row = jnp.broadcast_to(clean_ref[0], (N, N))               # c_row[i, j] = c[j]
        sorted_col = jnp.sum(perm * c_row, axis=-1, keepdims=True)   # (N, 1)

        # Reverse-cumulative logsumexp with O(N) exps:
        #   lse[i] = log sum_{j >= i} exp(sorted_s[j])
        m = jnp.max(sorted_col, axis=0, keepdims=True)               # (1, 1)
        ecol = jnp.exp(sorted_col - m)                               # (N, 1): N exps
        tailm = jnp.where(row_i >= col_j, ecol, 0.0)                 # mask * exp, (N, N)
        tail_row = jnp.sum(tailm, axis=0, keepdims=True)             # (1, N): sum_{i>=j}
        lse_row = m + jnp.log(tail_row)                              # (1, N)

        # log p = sum_i (sorted_s[i] - lse[i])
        logp = (jnp.sum(sorted_col, axis=0, keepdims=True)
                - jnp.sum(lse_row, axis=1, keepdims=True))           # (1, 1)
        logp_ref[0] = logp

    return kernel


def pallas_partition(pert_scores, clean_scores, filled_ohts, *, tau, hard):
    """perm (B,N,N), part (B,K,N), log_p (B,) fused in one Pallas call."""
    B, N = pert_scores.shape
    K = filled_ohts.shape[1]
    kernel = _make_partition_kernel(float(tau), bool(hard))

    # Grid over batch; one batch element per step so the VMEM working set is
    # ~8 * N^2 * 4 B regardless of B (fits v7x 64 MiB as well as v5e/v6e).
    # Block last-two-dims equal the full array dims, so the (8, 128) block
    # constraint is trivially satisfied for any N, K.
    # TODO(synk): for very large N additionally tile the permutation-row axis.
    perm, part, logp = pl.pallas_call(
        kernel,
        out_shape=(jax.ShapeDtypeStruct((B, N, N), jnp.float32),
                   jax.ShapeDtypeStruct((B, K, N), jnp.float32),
                   jax.ShapeDtypeStruct((B, 1, 1), jnp.float32)),
        grid=(B,),
        in_specs=[pl.BlockSpec((1, 1, N), lambda b: (b, 0, 0)),
                  pl.BlockSpec((1, 1, N), lambda b: (b, 0, 0)),
                  pl.BlockSpec((1, K, N), lambda b: (b, 0, 0))],
        out_specs=(pl.BlockSpec((1, N, N), lambda b: (b, 0, 0)),
                   pl.BlockSpec((1, K, N), lambda b: (b, 0, 0)),
                   pl.BlockSpec((1, 1, 1), lambda b: (b, 0, 0))),
        compiler_params=pltpu.CompilerParams(
            # Batch axis is independent -> megacore-shardable on v7x.
            dimension_semantics=("parallel",),
            # Above the 16/32 MiB scoped defaults (v5e/v6e), below v7x's 64 MiB.
            vmem_limit_bytes=40 * 1024 * 1024),
    )(pert_scores[:, None, :], clean_scores[:, None, :], filled_ohts)
    return perm, part, logp[:, 0, 0]


# ----------------------------------------------------------------------------
# MVHG (differentiable multivariate hypergeometric) -- sequential glue in JAX.
# TODO(synk): MVHG internals reconstructed from the DRPM paper (source class not
#             provided); sequential per-cluster Gumbel sampling stays in JAX.
# ----------------------------------------------------------------------------
def mvhg_sample(log_omega, num_samples, n_cluster, key, temperature,
                add_noise, hard, eps=1e-10):
    B = log_omega.shape[0]
    N, K = num_samples, n_cluster
    ks = jnp.arange(N + 1, dtype=jnp.float32)

    def log_binom(a, b):
        return (jax.lax.lgamma(a + 1.0) - jax.lax.lgamma(b + 1.0)
                - jax.lax.lgamma(a - b + 1.0))

    # filled-oht matrix: (y @ tril)[j] = sum_{k >= j} y[k]
    tril = (jnp.arange(N + 1)[:, None] >= jnp.arange(N + 1)[None, :]).astype(jnp.float32)

    n_rest = jnp.full((B, 1), float(N), jnp.float32)
    ohts, filled, nums = [], [], []
    log_p = jnp.zeros((B,), jnp.float32)
    keys = jax.random.split(key, K)
    neg = jnp.float32(-1e30)
    for i in range(K):
        m_i = float(N)
        m_rest = float((K - 1 - i) * N)
        rem = n_rest - ks[None, :]
        valid = (ks[None, :] <= jnp.minimum(m_i, n_rest)) & (rem >= 0.0) & (rem <= m_rest)
        logits = (log_binom(jnp.full_like(ks, m_i), ks)[None, :]
                  + log_binom(jnp.full_like(ks, m_rest), jnp.clip(rem, 0.0, m_rest))
                  + ks[None, :] * log_omega[:, i:i + 1])
        logits = jnp.where(valid, logits, neg)
        log_probs = jax.nn.log_softmax(logits, axis=-1)
        if add_noise:
            u = jax.random.uniform(keys[i], logits.shape, minval=eps, maxval=1.0)
            noisy = logits + (-jnp.log(-jnp.log(u)))
        else:
            noisy = logits
        y_soft = jax.nn.softmax(noisy / temperature, axis=-1)
        y_hard = jax.nn.one_hot(jnp.argmax(noisy, axis=-1), N + 1, dtype=jnp.float32)
        y = y_hard if hard else y_soft
        n_i = jnp.sum(ks[None, :] * y, axis=-1, keepdims=True)
        f_i = y @ tril
        ohts.append(y[:, None, :])
        filled.append(f_i[:, None, :])
        nums.append(n_i)
        log_p = log_p + jnp.sum(y_hard * log_probs, axis=-1)
        n_rest = n_rest - n_i
    return (jnp.concatenate(ohts, axis=1),          # (B, K, N+1)
            jnp.concatenate(nums, axis=-1),         # (B, K)
            filled,                                 # list of (B, 1, N+1)
            log_p)                                  # (B,)


# ----------------------------------------------------------------------------
# shift_filled_ohts -- mirrors the reference loop (K iterations) but replaces
# the (N+1, N, N) shift-matrix stack + dense matvecs with a gather:
#   col[b, n] = sum_{s <= n} selector[b, s] * v[b, n - s]
# ----------------------------------------------------------------------------
def shift_filled_ohts_fn(cat_filled):
    # cat_filled: (B, N, K)
    B, N, K = cat_filled.shape
    s_idx = jnp.arange(N + 1)[:, None]                     # (N+1, 1) shift amount
    n_idx = jnp.arange(N)[None, :]                         # (1, N)   target position
    src = n_idx - s_idx                                    # (N+1, N)
    valid = (src >= 0).astype(jnp.float32)
    src_c = jnp.clip(src, 0, N - 1)

    shifted_cols = []
    ssv = jnp.zeros((B, N + 1), jnp.float32)
    for i in range(K):
        prepended = jnp.concatenate([jnp.ones((B, 1), jnp.float32), ssv[:, :-1]], axis=1)
        selector = prepended - ssv                         # (B, N+1) soft one-hot shift
        v = cat_filled[:, :, i]                            # (B, N)
        shifted_versions = v[:, src_c] * valid[None, :, :] # (B, N+1, N): v shifted by s
        col = jnp.einsum('bs,bsn->bn', selector, shifted_versions)
        shifted_cols.append(col)
        ssv = ssv.at[:, :-1].add(col)
    return jnp.stack(shifted_cols, axis=1)                 # (B, K, N)


# ----------------------------------------------------------------------------
# RandPart.forward
# ----------------------------------------------------------------------------
def rand_part_forward(sort_log_score, mvhg_log_omega, key, *, n_cluster,
                      tau_mult=1.0, g_noise=True, hard_n=True, hard_pi=True,
                      temperature=0.01):
    assert mvhg_log_omega.shape[-1] == n_cluster
    B, N = sort_log_score.shape
    k_mvhg, k_pl = jax.random.split(key)

    # --- get_partition_sizes -------------------------------------------------
    ohts, num_per_cluster, filled_list, log_p_mvhg = mvhg_sample(
        mvhg_log_omega, N, n_cluster, k_mvhg, temperature, g_noise, hard_n)
    cat_filled = jnp.concatenate(filled_list, axis=1)            # (B, K, N+1)
    cat_filled = jnp.transpose(cat_filled, (0, 2, 1))[:, 1:, :]  # (B, N, K)
    shifted_filled_ohts = shift_filled_ohts_fn(cat_filled)       # (B, K, N)

    # --- get_partition (PL rsample + partition + log_prob) -> Pallas kernel --
    if g_noise:
        u = jax.random.uniform(k_pl, sort_log_score.shape, minval=1e-10, maxval=1.0)
        pert = sort_log_score + (-jnp.log(-jnp.log(u)))
    else:
        pert = sort_log_score
    perm, part, log_p_pi_n = pallas_partition(
        pert, sort_log_score, shifted_filled_ohts,
        tau=tau_mult * temperature, hard=hard_pi)

    return part, perm, ohts, shifted_filled_ohts, num_per_cluster, log_p_mvhg, log_p_pi_n


if __name__ == "__main__":
    B, N, K = 2, 8, 4          # batch, num_samples (sequence), n_cluster
    key = jax.random.PRNGKey(0)
    k_score, k_omega, k_fwd = jax.random.split(key, 3)
    sort_log_score = jax.random.normal(k_score, (B, N), jnp.float32)
    mvhg_log_omega = jax.random.normal(k_omega, (B, K), jnp.float32)

    fwd = jax.jit(functools.partial(rand_part_forward, n_cluster=K))
    outs = fwd(sort_log_score, mvhg_log_omega, k_fwd)
    outs = jax.block_until_ready(outs)

    part, perm, ohts, sfo, npc, lp_mvhg, lp_pi = outs
    assert part.shape == (B, K, N) and perm.shape == (B, N, N)
    assert sfo.shape == (B, K, N) and npc.shape == (B, K)
    assert lp_mvhg.shape == (B,) and lp_pi.shape == (B,)
    assert bool(jnp.all(jnp.isfinite(perm))) and bool(jnp.all(jnp.isfinite(part)))
    assert bool(jnp.all(jnp.isfinite(lp_mvhg))) and bool(jnp.all(jnp.isfinite(lp_pi)))
    # Each permutation row must be a (near-)one-hot summing to 1; partition in [0,1].
    assert bool(jnp.allclose(jnp.sum(perm, axis=-1), 1.0, atol=1e-5))
    assert bool(jnp.all((part >= 0.0) & (part <= 1.0)))
    print("KERNEL_OK")
</pallas_src>

<mosaic_0001>
module attributes {stable_mosaic.version = 11 : i64} {
  func.func @kernel(%arg0: i32, %arg1: memref<1x1x8xf32, #tpu.memory_space<vmem>>, %arg2: memref<1x1x8xf32, #tpu.memory_space<vmem>>, %arg3: memref<1x4x8xf32, #tpu.memory_space<vmem>>, %arg4: memref<1x8x8xf32, #tpu.memory_space<vmem>>, %arg5: memref<1x4x8xf32, #tpu.memory_space<vmem>>, %arg6: memref<1x1x1xf32, #tpu.memory_space<vmem>>) attributes {dimension_semantics = [#tpu.dimension_semantics<parallel>], iteration_bounds = array<i64: 2>, scalar_prefetch = 0 : i64, scratch_operands = 0 : i64, tpu.core_type = #tpu.core_type<tc>, window_params = [{transform_indices = @transform_0, window_bounds = array<i64: 1, 1, 8>}, {transform_indices = @transform_1, window_bounds = array<i64: 1, 1, 8>}, {transform_indices = @transform_2, window_bounds = array<i64: 1, 4, 8>}, {transform_indices = @transform_3, window_bounds = array<i64: 1, 8, 8>}, {transform_indices = @transform_4, window_bounds = array<i64: 1, 4, 8>}, {transform_indices = @transform_5, window_bounds = array<i64: 1, 1, 1>}]} {
    %c0 = arith.constant 0 : index
    %c0_0 = arith.constant 0 : index
    %c0_1 = arith.constant 0 : index
    %0 = vector.load %arg1[%c0, %c0_0, %c0_1] : memref<1x1x8xf32, #tpu.memory_space<vmem>>, vector<1x1x8xf32>
    %1 = vector.shape_cast %0 : vector<1x1x8xf32> to vector<1x8xf32>
    %2 = tpu.iota {dimensions = array<i32: 0>} : vector<8x8xi32>
    %3 = tpu.iota {dimensions = array<i32: 1>} : vector<8x8xi32>
    %4 = vector.shape_cast %1 : vector<1x8xf32> to vector<1x8xf32>
    %5 = vector.broadcast %4 : vector<1x8xf32> to vector<8x8xf32>
    %6 = arith.cmpi eq, %2, %3 : vector<8x8xi32>
    %7 = arith.extui %6 : vector<8x8xi1> to vector<8x8xi32>
    %8 = arith.sitofp %7 : vector<8x8xi32> to vector<8x8xf32>
    %9 = arith.mulf %5, %8 : vector<8x8xf32>
    %cst = arith.constant 1.000000e+00 : f32
    %10 = vector.broadcast %cst : f32 to vector<8x8xf32>
    %cst_2 = arith.constant dense<0.000000e+00> : vector<8x8xf32>
    %11 = tpu.matmul %9, %10, %cst_2 {dimension_numbers = #tpu.dot_dimension_numbers<[1], [0], [0], [1], [0, 0, 1, 1], [], []>} : vector<8x8xf32>, vector<8x8xf32>, vector<8x8xf32> -> vector<8x8xf32>
    %12 = arith.subf %11, %5 : vector<8x8xf32>
    %13 = math.absf %12 : vector<8x8xf32>
    %cst_3 = arith.constant dense<0.000000e+00> : vector<8xf32>
    %14 = vector.multi_reduction <add>, %13, %cst_3 [0] : vector<8x8xf32> to vector<8xf32>
    %15 = vector.shape_cast %14 : vector<8xf32> to vector<1x8xf32>
    %16 = arith.sitofp %2 : vector<8x8xi32> to vector<8x8xf32>
    %cst_4 = arith.constant 2.000000e+00 : f32
    %17 = vector.broadcast %cst_4 : f32 to vector<8x8xf32>
    %18 = arith.mulf %17, %16 : vector<8x8xf32>
    %cst_5 = arith.constant 7.000000e+00 : f32
    %19 = vector.broadcast %cst_5 : f32 to vector<8x8xf32>
    %20 = arith.subf %19, %18 : vector<8x8xf32>
    %21 = arith.mulf %20, %5 : vector<8x8xf32>
    %22 = vector.broadcast %15 : vector<1x8xf32> to vector<8x8xf32>
    %23 = arith.subf %21, %22 : vector<8x8xf32>
    %cst_6 = arith.constant 1.000000e+02 : f32
    %24 = vector.broadcast %cst_6 : f32 to vector<8x8xf32>
    %25 = arith.mulf %23, %24 : vector<8x8xf32>
    %cst_7 = arith.constant dense<0xFF800000> : vector<8xf32>
    %26 = vector.multi_reduction <maximumf>, %25, %cst_7 [1] : vector<8x8xf32> to vector<8xf32>
    %27 = vector.shape_cast %26 : vector<8xf32> to vector<8x1xf32>
    %28 = vector.broadcast %27 : vector<8x1xf32> to vector<8x8xf32>
    %29 = arith.cmpf oge, %25, %28 : vector<8x8xf32>
    %c8_i32 = arith.constant 8 : i32
    %30 = vector.broadcast %c8_i32 : i32 to vector<8x8xi32>
    %31 = arith.select %29, %3, %30 : vector<8x8xi1>, vector<8x8xi32>
    %cst_8 = arith.constant dense<2147483647> : vector<8xi32>
    %32 = vector.multi_reduction <minsi>, %31, %cst_8 [1] : vector<8x8xi32> to vector<8xi32>
    %33 = vector.shape_cast %32 : vector<8xi32> to vector<8x1xi32>
    %34 = vector.broadcast %33 : vector<8x1xi32> to vector<8x8xi32>
    %35 = arith.cmpi eq, %3, %34 : vector<8x8xi32>
    %36 = arith.extui %35 : vector<8x8xi1> to vector<8x8xi32>
    %37 = arith.sitofp %36 : vector<8x8xi32> to vector<8x8xf32>
    %c0_9 = arith.constant 0 : index
    %c0_10 = arith.constant 0 : index
    %c0_11 = arith.constant 0 : index
    %38 = vector.load %arg4[%c0_9, %c0_10, %c0_11] : memref<1x8x8xf32, #tpu.memory_space<vmem>>, vector<1x8x8xf32>
    %39 = vector.shape_cast %38 : vector<1x8x8xf32> to vector<8x8xf32>
    %40 = vector.shape_cast %37 : vector<8x8xf32> to vector<1x8x8xf32>
    tpu.vector_store %arg4[%c0_9, %c0_10, %c0_11], %40 {strides = array<i32>} : memref<1x8x8xf32, #tpu.memory_space<vmem>>, vector<1x8x8xf32>,
    %c0_12 = arith.constant 0 : index
    %c0_13 = arith.constant 0 : index
    %c0_14 = arith.constant 0 : index
    %41 = vector.load %arg3[%c0_12, %c0_13, %c0_14] : memref<1x4x8xf32, #tpu.memory_space<vmem>>, vector<1x4x8xf32>
    %42 = vector.shape_cast %41 : vector<1x4x8xf32> to vector<4x8xf32>
    %cst_15 = arith.constant dense<0.000000e+00> : vector<4x8xf32>
    %43 = tpu.matmul %42, %37, %cst_15 {dimension_numbers = #tpu.dot_dimension_numbers<[1], [0], [0], [1], [0, 0, 1, 1], [], []>} : vector<4x8xf32>, vector<8x8xf32>, vector<4x8xf32> -> vector<4x8xf32>
    %cst_16 = arith.constant 0.000000e+00 : f32
    %cst_17 = arith.constant 1.000000e+00 : f32
    %44 = vector.broadcast %cst_16 : f32 to vector<4x8xf32>
    %45 = arith.maximumf %44, %43 : vector<4x8xf32>
    %46 = vector.broadcast %cst_17 : f32 to vector<4x8xf32>
    %47 = arith.minimumf %46, %45 : vector<4x8xf32>
    %c0_18 = arith.constant 0 : index
    %c0_19 = arith.constant 0 : index
    %c0_20 = arith.constant 0 : index
    %48 = vector.load %arg5[%c0_18, %c0_19, %c0_20] : memref<1x4x8xf32, #tpu.memory_space<vmem>>, vector<1x4x8xf32>
    %49 = vector.shape_cast %48 : vector<1x4x8xf32> to vector<4x8xf32>
    %50 = vector.shape_cast %47 : vector<4x8xf32> to vector<1x4x8xf32>
    tpu.vector_store %arg5[%c0_18, %c0_19, %c0_20], %50 {strides = array<i32>} : memref<1x4x8xf32, #tpu.memory_space<vmem>>, vector<1x4x8xf32>,
    %c0_21 = arith.constant 0 : index
    %c0_22 = arith.constant 0 : index
    %c0_23 = arith.constant 0 : index
    %51 = vector.load %arg2[%c0_21, %c0_22, %c0_23] : memref<1x1x8xf32, #tpu.memory_space<vmem>>, vector<1x1x8xf32>
    %52 = vector.shape_cast %51 : vector<1x1x8xf32> to vector<1x8xf32>
    %53 = vector.shape_cast %52 : vector<1x8xf32> to vector<1x8xf32>
    %54 = vector.broadcast %53 : vector<1x8xf32> to vector<8x8xf32>
    %55 = arith.mulf %37, %54 : vector<8x8xf32>
    %cst_24 = arith.constant dense<0.000000e+00> : vector<8xf32>
    %56 = vector.multi_reduction <add>, %55, %cst_24 [1] : vector<8x8xf32> to vector<8xf32>
    %57 = vector.shape_cast %56 : vector<8xf32> to vector<8x1xf32>
    %cst_25 = arith.constant dense<0xFF800000> : vector<1xf32>
    %58 = vector.multi_reduction <maximumf>, %57, %cst_25 [0] : vector<8x1xf32> to vector<1xf32>
    %59 = vector.shape_cast %58 : vector<1xf32> to vector<1x1xf32>
    %60 = vector.broadcast %59 : vector<1x1xf32> to vector<8x1xf32>
    %61 = arith.subf %57, %60 : vector<8x1xf32>
    %62 = math.exp %61 : vector<8x1xf32>
    %63 = arith.cmpi sge, %2, %3 : vector<8x8xi32>
    %cst_26 = arith.constant 0.000000e+00 : f32
    %64 = vector.shape_cast %62 : vector<8x1xf32> to vector<8x1xf32>
    %65 = vector.broadcast %64 : vector<8x1xf32> to vector<8x8xf32>
    %66 = vector.broadcast %cst_26 : f32 to vector<8x8xf32>
    %67 = arith.select %63, %65, %66 : vector<8x8xi1>, vector<8x8xf32>
    %cst_27 = arith.constant dense<0.000000e+00> : vector<8xf32>
    %68 = vector.multi_reduction <add>, %67, %cst_27 [0] : vector<8x8xf32> to vector<8xf32>
    %69 = vector.shape_cast %68 : vector<8xf32> to vector<1x8xf32>
    %70 = math.log %69 : vector<1x8xf32>
    %71 = vector.broadcast %59 : vector<1x1xf32> to vector<1x8xf32>
    %72 = arith.addf %71, %70 : vector<1x8xf32>
    %cst_28 = arith.constant dense<0.000000e+00> : vector<1xf32>
    %73 = vector.multi_reduction <add>, %57, %cst_28 [0] : vector<8x1xf32> to vector<1xf32>
    %74 = vector.shape_cast %73 : vector<1xf32> to vector<1x1xf32>
    %cst_29 = arith.constant dense<0.000000e+00> : vector<1xf32>
    %75 = vector.multi_reduction <add>, %72, %cst_29 [1] : vector<1x8xf32> to vector<1xf32>
    %76 = vector.shape_cast %75 : vector<1xf32> to vector<1x1xf32>
    %77 = arith.subf %74, %76 : vector<1x1xf32>
    %c0_30 = arith.constant 0 : index
    %c0_31 = arith.constant 0 : index
    %c0_32 = arith.constant 0 : index
    %78 = vector.load %arg6[%c0_30, %c0_31, %c0_32] : memref<1x1x1xf32, #tpu.memory_space<vmem>>, vector<1x1x1xf32>
    %79 = vector.shape_cast %78 : vector<1x1x1xf32> to vector<1x1xf32>
    %80 = vector.shape_cast %77 : vector<1x1xf32> to vector<1x1x1xf32>
    tpu.vector_store %arg6[%c0_30, %c0_31, %c0_32], %80 {strides = array<i32>} : memref<1x1x1xf32, #tpu.memory_space<vmem>>, vector<1x1x1xf32>,
    return
  }
  func.func @transform_0(%arg0: i32) -> (i32, i32, i32) {
    %c0_i32 = arith.constant 0 : i32
    %c0_i32_0 = arith.constant 0 : i32
    %c0_i32_1 = arith.constant 0 : i32
    return %arg0, %c0_i32, %c0_i32_0 : i32, i32, i32
  }
  func.func @transform_1(%arg0: i32) -> (i32, i32, i32) {
    %c0_i32 = arith.constant 0 : i32
    %c0_i32_0 = arith.constant 0 : i32
    %c0_i32_1 = arith.constant 0 : i32
    return %arg0, %c0_i32, %c0_i32_0 : i32, i32, i32
  }
  func.func @transform_2(%arg0: i32) -> (i32, i32, i32) {
    %c0_i32 = arith.constant 0 : i32
    %c0_i32_0 = arith.constant 0 : i32
    %c0_i32_1 = arith.constant 0 : i32
    return %arg0, %c0_i32, %c0_i32_0 : i32, i32, i32
  }
  func.func @transform_3(%arg0: i32) -> (i32, i32, i32) {
    %c0_i32 = arith.constant 0 : i32
    %c0_i32_0 = arith.constant 0 : i32
    %c0_i32_1 = arith.constant 0 : i32
    return %arg0, %c0_i32, %c0_i32_0 : i32, i32, i32
  }
  func.func @transform_4(%arg0: i32) -> (i32, i32, i32) {
    %c0_i32 = arith.constant 0 : i32
    %c0_i32_0 = arith.constant 0 : i32
    %c0_i32_1 = arith.constant 0 : i32
    return %arg0, %c0_i32, %c0_i32_0 : i32, i32, i32
  }
  func.func @transform_5(%arg0: i32) -> (i32, i32, i32) {
    %c0_i32 = arith.constant 0 : i32
    %c0_i32_0 = arith.constant 0 : i32
    %c0_i32_1 = arith.constant 0 : i32
    return %arg0, %c0_i32, %c0_i32_0 : i32, i32, i32
  }
}

</mosaic_0001>

<llo_original>
// kernel: rand_part_forward.3
$region0: #{rand_part_forward.3}
  #allocation0 [shape = 'u32[]', space=smem, size = 0x4, offset = 0x4, fixed_abs, tag = 'smem constant byte address 0x4 - core index']
  #allocation1 [shape = 'u32[144,128]{1,0:T(1,128)}', space=vmem, size = 0x12000, scoped, tag = 'internal scratch']
  %s0 = inlined_call_operand.vmem [shape: f32[2,1,8], index: 0, kind: input, shape index: {}]
  %s1 = inlined_call_operand.vmem [shape: f32[2,1,8], index: 1, kind: input, shape index: {}]
  %s2 = inlined_call_operand.vmem [shape: f32[2,4,8], index: 2, kind: input, shape index: {}]
  %s3 = inlined_call_operand.hbm [shape: f32[2,8,8], index: 3, kind: output, shape index: {0}]
  %s4 = inlined_call_operand.hbm [shape: f32[2,4,8], index: 4, kind: output, shape index: {1}]
  %s5 = inlined_call_operand.vmem [shape: f32[2,1,1], index: 5, kind: output, shape index: {2}]
  %6 = xla_tuple %s3, %s4, %s5
  %s7 = sld [smem:[#allocation0]]
  $region61: #{rand_part_forward.3} parent=0
    _
  %s9 = ssub.s32 1, %s7
  %s10 = scalar_select 0, %s9, %s7
  $region1: #{rand_part_forward.3} parent=0
    #allocation2 [shape = 'u8[8192]{0}', space=vmem, size = 0x2000, scoped, tag = 'output window, operand 0']
    #allocation3 [shape = 's32[2]{0}', space=sflag, size = 0x8, scoped, tag = 'scoped memory for rand_part_forward.3']
    #allocation4 [shape = 'u8[4096]{0}', space=vmem, size = 0x1000, scoped, tag = 'output window, operand 1']
    #allocation5 [shape = 's32[2]{0}', space=sflag, size = 0x8, scoped, tag = 'scoped memory for rand_part_forward.3']
    %11 = vsyncpa [#allocation3], 0
    %s12 = scalar_lea.sflag [#allocation3], 1
    %13 = vsyncpa %s12, 0
    %14 = vsyncpa [#allocation5], 0
    %s15 = scalar_lea.sflag [#allocation5], 1
    %16 = vsyncpa %s15, 0
    loop: start=0, step=1, limit=4
    $region2: #{rand_part_forward.3} parent=1 // loop_pre_header
      _
    $region3: #{rand_part_forward.3} parent=1 // loop_header
      %s18 = sphi 0, %s22
      %p19 = scmp.ge.s32.totalorder %s18, 4
      %s28 = sphi 0, %s30
      %s31 = sphi 0, %s28
      %s32 = sphi 0, %s31
      %s48 = sphi 0, %s32
      %s54 = sphi 0, %s56
      %s57 = sphi 0, %s54
      %s58 = sphi 0, %s57
      %s74 = sphi 0, %s58
      %s80 = sphi 0, %s82
      %s83 = sphi 0, %s80
      %s84 = sphi 0, %s83
      %s100 = sphi 0, %s84
      %s106 = sphi 0, %s108
      %s109 = sphi 0, %s106
      %s110 = sphi 0, %s109
      %s126 = sphi 0, %s110
      %s132 = sphi 0, %s134
      %s135 = sphi 0, %s132
      %s136 = sphi 0, %s135
      %s152 = sphi 0, %s136
      %s158 = sphi 0, %s160
      %s161 = sphi 0, %s158
      %s162 = sphi 0, %s161
      %s178 = sphi 0, %s162
    $region4: #{rand_part_forward.3} parent=1 // loop_header_branch
      %21 = sbr.rel (%p19) target = $region8
    $region5: #{rand_part_forward.3} parent=1 // loop_body
      %s23 = ssub.s32 %s18, 1
      %s24 = ssub.s32 %s18, 2
      %s25 = sadd.s32 %s18, 1
      %s26 = ssub.s32 %s18, %s25
      %p27 = scmp.eq.s32.totalorder %s26, 0
      %s29 = sadd.s32 %s28, 1
      %s30 = scalar_select %p27, %s28, %s29
      %p33 = pneg %p27
      %p34 = scmp.eq.s32.totalorder %s18, 1
      %p35 = por %p33, %p34
      %p36 = scmp.ne.s32.totalorder %s28, %s31
      %p37 = scmp.eq.s32.totalorder %s18, 0
      %p38 = por %p36, %p37
      %p39 = scmp.ne.s32.totalorder %s28, %s31
      %p40 = scmp.eq.s32.totalorder %s23, 1
      %p41 = por %p39, %p40
      %p42 = scmp.ne.s32.totalorder %s31, %s32
      %p43 = scmp.eq.s32.totalorder %s23, 0
      %p44 = por %p42, %p43
      %p45 = scmp.ne.s32.totalorder %s31, %s32
      %p46 = scmp.eq.s32.totalorder %s24, 1
      %p47 = por %p45, %p46
      %p49 = scmp.ne.s32.totalorder %s32, %s48
      %p50 = scmp.eq.s32.totalorder %s24, 0
      %p51 = por %p49, %p50
      %s52 = ssub.s32 %s18, %s25
      %p53 = scmp.eq.s32.totalorder %s52, 0
      %s55 = sadd.s32 %s54, 1
      %s56 = scalar_select %p53, %s54, %s55
      %p59 = pneg %p53
      %p60 = scmp.eq.s32.totalorder %s18, 1
      %p61 = por %p59, %p60
      %p62 = scmp.ne.s32.totalorder %s54, %s57
      %p63 = scmp.eq.s32.totalorder %s18, 0
      %p64 = por %p62, %p63
      %p65 = scmp.ne.s32.totalorder %s54, %s57
      %p66 = scmp.eq.s32.totalorder %s23, 1
      %p67 = por %p65, %p66
      %p68 = scmp.ne.s32.totalorder %s57, %s58
      %p69 = scmp.eq.s32.totalorder %s23, 0
      %p70 = por %p68, %p69
      %p71 = scmp.ne.s32.totalorder %s57, %s58
      %p72 = scmp.eq.s32.totalorder %s24, 1
      %p73 = por %p71, %p72
      %p75 = scmp.ne.s32.totalorder %s58, %s74
      %p76 = scmp.eq.s32.totalorder %s24, 0
      %p77 = por %p75, %p76
      %s78 = ssub.s32 %s18, %s25
      %p79 = scmp.eq.s32.totalorder %s78, 0
      %s81 = sadd.s32 %s80, 1
      %s82 = scalar_select %p79, %s80, %s81
      %p85 = pneg %p79
      %p86 = scmp.eq.s32.totalorder %s18, 1
      %p87 = por %p85, %p86
      %p88 = scmp.ne.s32.totalorder %s80, %s83
      %p89 = scmp.eq.s32.totalorder %s18, 0
      %p90 = por %p88, %p89
      %p91 = scmp.ne.s32.totalorder %s80, %s83
      %p92 = scmp.eq.s32.totalorder %s23, 1
      %p93 = por %p91, %p92
      %p94 = scmp.ne.s32.totalorder %s83, %s84
      %p95 = scmp.eq.s32.totalorder %s23, 0
      %p96 = por %p94, %p95
      %p97 = scmp.ne.s32.totalorder %s83, %s84
      %p98 = scmp.eq.s32.totalorder %s24, 1
      %p99 = por %p97, %p98
      %p101 = scmp.ne.s32.totalorder %s84, %s100
      %p102 = scmp.eq.s32.totalorder %s24, 0
      %p103 = por %p101, %p102
      %s104 = ssub.s32 %s18, %s25
      %p105 = scmp.eq.s32.totalorder %s104, 0
      %s107 = sadd.s32 %s106, 1
      %s108 = scalar_select %p105, %s106, %s107
      %p111 = pneg %p105
      %p112 = scmp.eq.s32.totalorder %s18, 1
      %p113 = por %p111, %p112
      %p114 = scmp.ne.s32.totalorder %s106, %s109
      %p115 = scmp.eq.s32.totalorder %s18, 0
      %p116 = por %p114, %p115
      %p117 = scmp.ne.s32.totalorder %s106, %s109
      %p118 = scmp.eq.s32.totalorder %s23, 1
      %p119 = por %p117, %p118
      %p120 = scmp.ne.s32.totalorder %s109, %s110
      %p121 = scmp.eq.s32.totalorder %s23, 0
      %p122 = por %p120, %p121
      %p123 = scmp.ne.s32.totalorder %s109, %s110
      %p124 = scmp.eq.s32.totalorder %s24, 1
      %p125 = por %p123, %p124
      %p127 = scmp.ne.s32.totalorder %s110, %s126
      %p128 = scmp.eq.s32.totalorder %s24, 0
      %p129 = por %p127, %p128
      %s130 = ssub.s32 %s18, %s25
      %p131 = scmp.eq.s32.totalorder %s130, 0
      %s133 = sadd.s32 %s132, 1
      %s134 = scalar_select %p131, %s132, %s133
      %p137 = pneg %p131
      %p138 = scmp.eq.s32.totalorder %s18, 1
      %p139 = por %p137, %p138
      %p140 = scmp.ne.s32.totalorder %s132, %s135
      %p141 = scmp.eq.s32.totalorder %s18, 0
      %p142 = por %p140, %p141
      %p143 = scmp.ne.s32.totalorder %s132, %s135
      %p144 = scmp.eq.s32.totalorder %s23, 1
      %p145 = por %p143, %p144
      %p146 = scmp.ne.s32.totalorder %s135, %s136
      %p147 = scmp.eq.s32.totalorder %s23, 0
      %p148 = por %p146, %p147
      %p149 = scmp.ne.s32.totalorder %s135, %s136
      %p150 = scmp.eq.s32.totalorder %s24, 1
      %p151 = por %p149, %p150
      %p153 = scmp.ne.s32.totalorder %s136, %s152
      %p154 = scmp.eq.s32.totalorder %s24, 0
      %p155 = por %p153, %p154
      %s156 = ssub.s32 %s18, %s25
      %p157 = scmp.eq.s32.totalorder %s156, 0
      %s159 = sadd.s32 %s158, 1
      %s160 = scalar_select %p157, %s158, %s159
      %p163 = pneg %p157
      %p164 = scmp.eq.s32.totalorder %s18, 1
      %p165 = por %p163, %p164
      %p166 = scmp.ne.s32.totalorder %s158, %s161
      %p167 = scmp.eq.s32.totalorder %s18, 0
      %p168 = por %p166, %p167
      %p169 = scmp.ne.s32.totalorder %s158, %s161
      %p170 = scmp.eq.s32.totalorder %s23, 1
      %p171 = por %p169, %p170
      %p172 = scmp.ne.s32.totalorder %s161, %s162
      %p173 = scmp.eq.s32.totalorder %s23, 0
      %p174 = por %p172, %p173
      %p175 = scmp.ne.s32.totalorder %s161, %s162
      %p176 = scmp.eq.s32.totalorder %s24, 1
      %p177 = por %p175, %p176
      %p179 = scmp.ne.s32.totalorder %s162, %s178
      %p180 = scmp.eq.s32.totalorder %s24, 0
      %p181 = por %p179, %p180
      %p182 = scmp.le.s32.totalorder 1, %s18
      %p183 = scmp.lt.s32.totalorder %s18, 3
      %p184 = pnand %p182, %p183
      %p185 = pneg %p184
      // Predicated region
      $region9: #{rand_part_forward.3} parent=5 // pred_check
        _
      $region10: #{rand_part_forward.3} parent=5 // pred_check_branch
        %187 = sbr.rel (%p184) target = $region12
      $region11: #{rand_part_forward.3} parent=5 // pred_region
        %s188 = ssub.s32 %s18, 1
      $region12: #{rand_part_forward.3} parent=5 // pred_fallthru
        _
      %p189 = scmp.lt.s32.totalorder %s18, 2
      // Predicated region
      $region13: #{rand_part_forward.3} parent=5 // pred_check
        %p190 = pneg %p189
      $region14: #{rand_part_forward.3} parent=5 // pred_check_branch
        %192 = sbr.rel (%p190) target = $region16
      $region15: #{rand_part_forward.3} parent=5 // pred_region
        // Predicated region
        $region17: #{rand_part_forward.3} parent=15 // pred_check
          %p193 = pneg %p38
        $region18: #{rand_part_forward.3} parent=15 // pred_check_branch
          %195 = sbr.rel (%p193) target = $region20
        $region19: #{rand_part_forward.3} parent=15 // pred_region
          %p196 = scmp.lt.s32.totalorder %s18, 1
          %s197 = scalar_select %p196, %s18, 1
          %s198 = scalar_lea.vmem %s0, %s197
        $region20: #{rand_part_forward.3} parent=15 // pred_fallthru
          _
        // Predicated region
        $region21: #{rand_part_forward.3} parent=15 // pred_check
          %p199 = pneg %p64
        $region22: #{rand_part_forward.3} parent=15 // pred_check_branch
          %201 = sbr.rel (%p199) target = $region24
        $region23: #{rand_part_forward.3} parent=15 // pred_region
          %p202 = scmp.lt.s32.totalorder %s18, 1
          %s203 = scalar_select %p202, %s18, 1
          %s204 = scalar_lea.vmem %s1, %s203
        $region24: #{rand_part_forward.3} parent=15 // pred_fallthru
          _
        // Predicated region
        $region25: #{rand_part_forward.3} parent=15 // pred_check
          %p205 = pneg %p90
        $region26: #{rand_part_forward.3} parent=15 // pred_check_branch
          %207 = sbr.rel (%p205) target = $region28
        $region27: #{rand_part_forward.3} parent=15 // pred_region
          %p208 = scmp.lt.s32.totalorder %s18, 1
          %s209 = scalar_select %p208, %s18, 1
          %s210 = smul.addr %s209, 4
          %s211 = scalar_lea.vmem %s2, %s210
        $region28: #{rand_part_forward.3} parent=15 // pred_fallthru
          _
      $region16: #{rand_part_forward.3} parent=5 // pred_fallthru
        _
      %p212 = scmp.le.s32.totalorder 1, %s18
      %p213 = scmp.lt.s32.totalorder %s18, 3
      %p214 = pnand %p212, %p213
      %p215 = pneg %p214
      // Predicated region
      $region29: #{rand_part_forward.3} parent=5 // pred_check
        _
      $region30: #{rand_part_forward.3} parent=5 // pred_check_branch
        %217 = sbr.rel (%p214) target = $region32
      $region31: #{rand_part_forward.3} parent=5 // pred_region
        %s218 = ssub.s32 %s18, 1
        %p219 = scmp.lt.s32.totalorder %s23, 1
        %s220 = scalar_select %p219, %s23, 1
        %s221 = scalar_lea.vmem %s0, %s220
        %p222 = pneg %p44
        %p223 = pneg %p41
        %p224 = scmp.lt.s32.totalorder %s23, 1
        %s225 = scalar_select %p224, %s23, 1
        %s226 = scalar_lea.vmem %s1, %s225
        %p227 = pneg %p70
        %p228 = pneg %p67
        %p229 = scmp.lt.s32.totalorder %s23, 1
        %s230 = scalar_select %p229, %s23, 1
        %s231 = smul.addr %s230, 4
        %s232 = scalar_lea.vmem %s2, %s231
        %p233 = pneg %p96
        %p234 = pneg %p93
        %p235 = pneg %p122
        %p236 = pneg %p119
        %s237 = sand.u32 %s109, 1
        %s238 = scalar_lea.sflag [#allocation3], %s237
        %s239 = sand.u32 %s109, 1
        %s240 = smul.addr %s239, 8
        %s241 = scalar_lea.vmem [#allocation2], %s240
        %p242 = pneg %p148
        %p243 = pneg %p145
        %s244 = sand.u32 %s135, 1
        %s245 = scalar_lea.sflag [#allocation5], %s244
        %s246 = sand.u32 %s135, 1
        %s247 = smul.addr %s246, 4
        %s248 = scalar_lea.vmem [#allocation4], %s247
        %p249 = pneg %p174
        %p250 = pneg %p171
        %p251 = scmp.lt.s32.totalorder %s23, 1
        %s252 = scalar_select %p251, %s23, 1
        %s253 = scalar_lea.vmem %s5, %s252
        %p254 = scmp.lt.s32.totalorder %s23, 1
        %s255 = scalar_select %p254, %s23, 1
        %s256 = scalar_lea.vmem %s0, %s255
        %p257 = scmp.lt.s32.totalorder %s23, 1
        %s258 = scalar_select %p257, %s23, 1
        %s259 = scalar_lea.vmem %s1, %s258
        %p260 = scmp.lt.s32.totalorder %s23, 1
        %s261 = scalar_select %p260, %s23, 1
        %s262 = smul.addr %s261, 4
        %s263 = scalar_lea.vmem %s2, %s262
        %p264 = scmp.lt.s32.totalorder %s23, 1
        %s265 = scalar_select %p264, %s23, 1
        %s266 = scalar_lea.vmem %s5, %s265
        %v267 = vld [vmem:[%s256] sm:$0x1]
        %v268 = vlaneseq
        %v269 = vshrl.u32 %v268, 7
        %v270 = vlaneseq
        %v271 = vand.u32 %v270, 127
        %v273 = vlaneseq
        %v274 = vshrl.u32 %v273, 7
        %v275 = vsub.s32 0, %v274
        %v276 = vrot.slane %v267, %v275
        %vm278 = vcmp.eq.s32.totalorder %v269, %v271
        %v279 = vsel %vm278, 1, 0
        %v280 = vcvt.s32.f32 %v279
        %v281 = vmul.f32 %v276, %v280
        %vm282 = vcmask 64512
        %v284 = vsel %vm282, %v281, 0
        %286 = vmatprep.subr.mxu0 0.0
        %287 = vmatpush1.msra.mxu0 0.0
        %288 = vmatprep.subr.mxu0 0.0
        %289 = vmatpush1.msra.mxu0 0.0
        %290 = vmatprep.subr.mxu0 0.0
        %291 = vmatpush1.msra.mxu0 0.0
        %292 = vmatprep.subr.mxu0 0.0
        %293 = vmatpush1.msra.mxu0 0.0
        %294 = vmatprep.subr.mxu0 0.0
        %295 = vmatpush1.msra.mxu0 0.0
        %296 = vmatprep.subr.mxu0 0.0
        %297 = vmatpush1.msra.mxu0 0.0
        %298 = vmatprep.subr.mxu0 0.0
        %299 = vmatpush1.msra.mxu0 0.0
        %300 = vmatprep.subr.mxu0 0.0
        %301 = vmatpush1.msra.mxu0 0.0
        %302 = vmatprep.subr.mxu0 0.0
        %303 = vmatpush1.msra.mxu0 0.0
        %304 = vmatprep.subr.mxu0 0.0
        %305 = vmatpush1.msra.mxu0 0.0
        %306 = vmatprep.subr.mxu0 0.0
        %307 = vmatpush1.msra.mxu0 0.0
        %308 = vmatprep.subr.mxu0 0.0
        %309 = vmatpush1.msra.mxu0 0.0
        %310 = vmatprep.subr.mxu0 0.0
        %311 = vmatpush1.msra.mxu0 0.0
        %312 = vmatprep.subr.mxu0 0.0
        %313 = vmatpush1.msra.mxu0 0.0
        %314 = vmatprep.subr.mxu0 0.0
        %315 = vmatpush1.msra.mxu0 0.0
        %316 = vmatprep.subr.mxu0 0.0
        %317 = vmatpush1.msra.mxu0 1.0
        %318 = vmatprep.subr.mxu0 0.0
        %319 = vmatpush2.msra.mxu0 0.0
        %320 = vmatprep.subr.mxu0 0.0
        %321 = vmatpush2.msra.mxu0 0.0
        %322 = vmatprep.subr.mxu0 0.0
        %323 = vmatpush2.msra.mxu0 0.0
        %324 = vmatprep.subr.mxu0 0.0
        %325 = vmatpush2.msra.mxu0 0.0
        %326 = vmatprep.subr.mxu0 0.0
        %327 = vmatpush2.msra.mxu0 0.0
        %328 = vmatprep.subr.mxu0 0.0
        %329 = vmatpush2.msra.mxu0 0.0
        %330 = vmatprep.subr.mxu0 0.0
        %331 = vmatpush2.msra.mxu0 0.0
        %332 = vmatprep.subr.mxu0 0.0
        %333 = vmatpush2.msra.mxu0 0.0
        %334 = vmatprep.subr.mxu0 0.0
        %335 = vmatpush2.msra.mxu0 0.0
        %336 = vmatprep.subr.mxu0 0.0
        %337 = vmatpush2.msra.mxu0 0.0
        %338 = vmatprep.subr.mxu0 0.0
        %339 = vmatpush2.msra.mxu0 0.0
        %340 = vmatprep.subr.mxu0 0.0
        %341 = vmatpush2.msra.mxu0 0.0
        %342 = vmatprep.subr.mxu0 0.0
        %343 = vmatpush2.msra.mxu0 0.0
        %344 = vmatprep.subr.mxu0 0.0
        %345 = vmatpush2.msra.mxu0 0.0
        %346 = vmatprep.subr.mxu0 0.0
        %347 = vmatpush2.msra.mxu0 0.0
        %348 = vmatprep.subr.mxu0 0.0
        %349 = vmatpush2.msra.mxu0 0.0
        %350 = vmatprep.mubr.f32.mxu0 0.0
        %351 = vmatmul.mubr.f32.gmra.mxu0 %v284
        %v352 = vpop.f32.mrf.mxu0
        %v353 = vadd.f32 0.0, %v352
        %v354 = vpop.f32.mrf.mxu0
        %355 = vdwg.mxu0
        %v356 = vsub.f32 %v353, %v276
        %v357 = vand.u32 2147483647, %v356
        %v358 = vsel %vm282, %v357, 0.0
        %v359 = vrot.slane %v358, 4
        %v360 = vadd.f32 %v358, %v359
        %v361 = vrot.slane %v360, 2
        %v362 = vadd.f32 %v360, %v361
        %v363 = vrot.slane %v362, 1
        %v364 = vadd.f32 %v362, %v363
        %v365 = vcvt.s32.f32 %v269
        %v366 = vmul.f32 %v365, 2.0
        %v367 = vsub.f32 7.0, %v366
        %v368 = vmul.f32 %v367, %v276
        %v369 = vsub.f32 %v368, %v364
        %v370 = vmul.f32 %v369, 100.0
        %v371 = vsel %vm282, %v370, -inf
        %372 = vmax.xlane.f32.xlu0 %v371
        %v373 = vpop.xlane.xlu0 %372
        %vm374 = vcmp.ge.f32.partialorder %v370, %v373
        %v375 = vsel %vm374, %v271, 8
        %v376 = vsel %vm282, %v375, 2147483647
        %v377 = vand.u32 %v376, 65535
        %v378 = vshra.s32 %v376, 16
        %v379 = vcvt.s32.f32 %v377
        %v380 = vcvt.s32.f32 %v378
        %381 = vmin.xlane.f32.xlu0 %v380
        %v382 = vpop.xlane.xlu0 %381
        %vm383 = vcmp.eq.f32.partialorder %v380, %v382
        %v384 = vsel %vm383, %v379, inf
        %385 = vmin.xlane.f32.xlu0 %v384
        %v386 = vpop.xlane.xlu0 %385
        %v387 = vcvt.f32.s32 %v386
        %v388 = vcvt.f32.s32 %v382
        %v389 = vshll.u32 %v388, 16
        %v390 = vadd.s32 %v389, %v387
        %vm391 = vcmp.eq.s32.totalorder %v271, %v390
        %v392 = vsel %vm391, 1, 0
        %v393 = vcvt.s32.f32 %v392
        %394 = vst.msk [vmem:[%s241] sm:$0xff] %vm282, %v393
        %v395 = vld [vmem:[%s263] sm:$0xf]
        %v397 = vsel %vm282, %v395, 0
        %399 = vmatprep.subr.mxu0 0.0
        %400 = vmatpush1.msra.mxu0 0.0
        %401 = vmatprep.subr.mxu0 0.0
        %402 = vmatpush1.msra.mxu0 0.0
        %403 = vmatprep.subr.mxu0 0.0
        %404 = vmatpush1.msra.mxu0 0.0
        %405 = vmatprep.subr.mxu0 0.0
        %406 = vmatpush1.msra.mxu0 0.0
        %407 = vmatprep.subr.mxu0 0.0
        %408 = vmatpush1.msra.mxu0 0.0
        %409 = vmatprep.subr.mxu0 0.0
        %410 = vmatpush1.msra.mxu0 0.0
        %411 = vmatprep.subr.mxu0 0.0
        %412 = vmatpush1.msra.mxu0 0.0
        %413 = vmatprep.subr.mxu0 0.0
        %414 = vmatpush1.msra.mxu0 0.0
        %415 = vmatprep.subr.mxu0 0.0
        %416 = vmatpush1.msra.mxu0 0.0
        %417 = vmatprep.subr.mxu0 0.0
        %418 = vmatpush1.msra.mxu0 0.0
        %419 = vmatprep.subr.mxu0 0.0
        %420 = vmatpush1.msra.mxu0 0.0
        %421 = vmatprep.subr.mxu0 0.0
        %422 = vmatpush1.msra.mxu0 0.0
        %423 = vmatprep.subr.mxu0 0.0
        %424 = vmatpush1.msra.mxu0 0.0
        %425 = vmatprep.subr.mxu0 0.0
        %426 = vmatpush1.msra.mxu0 0.0
        %427 = vmatprep.subr.mxu0 0.0
        %428 = vmatpush1.msra.mxu0 0.0
        %429 = vmatprep.subr.mxu0 0.0
        %430 = vmatpush1.msra.mxu0 %v393
        %431 = vmatprep.subr.mxu0 0.0
        %432 = vmatpush2.msra.mxu0 0.0
        %433 = vmatprep.subr.mxu0 0.0
        %434 = vmatpush2.msra.mxu0 0.0
        %435 = vmatprep.subr.mxu0 0.0
        %436 = vmatpush2.msra.mxu0 0.0
        %437 = vmatprep.subr.mxu0 0.0
        %438 = vmatpush2.msra.mxu0 0.0
        %439 = vmatprep.subr.mxu0 0.0
        %440 = vmatpush2.msra.mxu0 0.0
        %441 = vmatprep.subr.mxu0 0.0
        %442 = vmatpush2.msra.mxu0 0.0
        %443 = vmatprep.subr.mxu0 0.0
        %444 = vmatpush2.msra.mxu0 0.0
        %445 = vmatprep.subr.mxu0 0.0
        %446 = vmatpush2.msra.mxu0 0.0
        %447 = vmatprep.subr.mxu0 0.0
        %448 = vmatpush2.msra.mxu0 0.0
        %449 = vmatprep.subr.mxu0 0.0
        %450 = vmatpush2.msra.mxu0 0.0
        %451 = vmatprep.subr.mxu0 0.0
        %452 = vmatpush2.msra.mxu0 0.0
        %453 = vmatprep.subr.mxu0 0.0
        %454 = vmatpush2.msra.mxu0 0.0
        %455 = vmatprep.subr.mxu0 0.0
        %456 = vmatpush2.msra.mxu0 0.0
        %457 = vmatprep.subr.mxu0 0.0
        %458 = vmatpush2.msra.mxu0 0.0
        %459 = vmatprep.subr.mxu0 0.0
        %460 = vmatpush2.msra.mxu0 0.0
        %461 = vmatprep.subr.mxu0 0.0
        %462 = vmatpush2.msra.mxu0 0.0
        %463 = vmatprep.mubr.f32.mxu0 0.0
        %464 = vmatmul.mubr.f32.gmra.mxu0 %v397
        %v465 = vpop.f32.mrf.mxu0
        %v466 = vadd.f32 0.0, %v465
        %v467 = vpop.f32.mrf.mxu0
        %468 = vdwg.mxu0
        %v469 = vmax.f32 %v466, 0.0
        %v470 = vmin.f32 %v469, 1.0
        %vm471 = vcmask 60416
        %472 = vst.msk [vmem:[%s248] sm:$0xf] %vm471, %v470
        %v473 = vld [vmem:[%s259] sm:$0x1]
        %v475 = vlaneseq
        %v476 = vshrl.u32 %v475, 7
        %v477 = vsub.s32 0, %v476
        %v478 = vrot.slane %v473, %v477
        %v480 = vmul.f32 %v393, %v478
        %v481 = vsel %vm282, %v480, 0.0
        %482 = vadd.xlane.f32.xlu0 %v481
        %v483 = vpop.xlane.xlu0 %482
        %v484 = vrot.slane %v483, 4
        %v485 = vmax.f32 %v483, %v484
        %v486 = vrot.slane %v485, 2
        %v487 = vmax.f32 %v485, %v486
        %v488 = vrot.slane %v487, 1
        %v489 = vmax.f32 %v487, %v488
        %v490 = vsub.f32 %v483, %v489
        %v491 = vmul.f32 %v490, 1.442695
        %v492 = vpow.pop %v491
        %vm493 = vcmp.ge.s32.totalorder %v269, %v271
        %v494 = vsel %vm493, %v492, 0.0
        %v495 = vsel %vm282, %v494, 0.0
        %v496 = vrot.slane %v495, 4
        %v497 = vadd.f32 %v495, %v496
        %v498 = vrot.slane %v497, 2
        %v499 = vadd.f32 %v497, %v498
        %v500 = vrot.slane %v499, 1
        %v501 = vadd.f32 %v499, %v500
        %v502 = vlog2.pop %v501
        %v503 = vmul.f32 %v502, 0.6931472
        %v504 = vadd.f32 %v489, %v503
        %v505 = vrot.slane %v483, 4
        %v506 = vadd.f32 %v483, %v505
        %v507 = vrot.slane %v506, 2
        %v508 = vadd.f32 %v506, %v507
        %v509 = vrot.slane %v508, 1
        %v510 = vadd.f32 %v508, %v509
        %v511 = vsel %vm282, %v504, 0.0
        %512 = vadd.xlane.f32.xlu0 %v511
        %v513 = vpop.xlane.xlu0 %512
        %v514 = vsub.f32 %v510, %v513
        %vm515 = vcmask 0
        %516 = vst.msk [vmem:[%s266] sm:$0x1] %vm515, %v514
        %s517 = sand.u32 %s109, 1
        %s518 = scalar_lea.sflag [#allocation3], %s517
        %s519 = sand.u32 %s109, 1
        %s520 = smul.addr %s519, 8
        %s521 = scalar_lea.vmem [#allocation2], %s520
        %s522 = sand.u32 %s135, 1
        %s523 = scalar_lea.sflag [#allocation5], %s522
        %s524 = sand.u32 %s135, 1
        %s525 = smul.addr %s524, 4
        %s526 = scalar_lea.vmem [#allocation4], %s525
        %p527 = scmp.lt.s32.totalorder %s23, 1
        %s528 = scalar_select %p527, %s23, 1
        %s529 = scalar_lea.vmem %s5, %s528
        // Predicated region
        $region33: #{rand_part_forward.3} parent=31 // pred_check
          %p530 = pneg %p119
        $region34: #{rand_part_forward.3} parent=31 // pred_check_branch
          %532 = sbr.rel (%p530) target = $region36
        $region35: #{rand_part_forward.3} parent=31 // pred_region
          %s534 = ssub.s32 128, 128
          %535 = vsyncadd %s518, %s534
          %s536 = smul.addr %s23, 128
          %s537 = scalar_lea.hbm %s3, %s536
          %s539 = sshll.u32 %s521, 4
          %s540 = int_to_ptr.vmem [resolvable:$true] %s539
          %542 = dma.vmem_to_hbm [thread:$0]  %s540, 128, %s537, %s518
        $region36: #{rand_part_forward.3} parent=31 // pred_fallthru
          _
        // Predicated region
        $region37: #{rand_part_forward.3} parent=31 // pred_check
          %p543 = pneg %p145
        $region38: #{rand_part_forward.3} parent=31 // pred_check_branch
          %545 = sbr.rel (%p543) target = $region40
        $region39: #{rand_part_forward.3} parent=31 // pred_region
          %s547 = ssub.s32 64, 64
          %548 = vsyncadd %s523, %s547
          %s549 = smul.addr %s23, 64
          %s550 = scalar_lea.hbm %s4, %s549
          %s552 = sshll.u32 %s526, 4
          %s553 = int_to_ptr.vmem [resolvable:$true] %s552
          %555 = dma.vmem_to_hbm [thread:$0]  %s553, 64, %s550, %s523
        $region40: #{rand_part_forward.3} parent=31 // pred_fallthru
          _
        // Predicated region
        $region41: #{rand_part_forward.3} parent=31 // pred_check
          %p556 = pneg %p171
        $region42: #{rand_part_forward.3} parent=31 // pred_check_branch
          %558 = sbr.rel (%p556) target = $region44
        $region43: #{rand_part_forward.3} parent=31 // pred_region
          _
        $region44: #{rand_part_forward.3} parent=31 // pred_fallthru
          _
      $region32: #{rand_part_forward.3} parent=5 // pred_fallthru
        _
      %p559 = scmp.le.s32.totalorder 2, %s18
      // Predicated region
      $region45: #{rand_part_forward.3} parent=5 // pred_check
        %p560 = pneg %p559
      $region46: #{rand_part_forward.3} parent=5 // pred_check_branch
        %562 = sbr.rel (%p560) target = $region48
      $region47: #{rand_part_forward.3} parent=5 // pred_region
        %s563 = ssub.s32 %s18, 2
        // Predicated region
        $region49: #{rand_part_forward.3} parent=47 // pred_check
          %p564 = pneg %p125
        $region50: #{rand_part_forward.3} parent=47 // pred_check_branch
          %566 = sbr.rel (%p564) target = $region52
        $region51: #{rand_part_forward.3} parent=47 // pred_region
          %s567 = sand.u32 %s110, 1
          %s568 = scalar_lea.sflag [#allocation3], %s567
          %s569 = sand.u32 %s110, 1
          %s570 = smul.addr %s569, 8
          %s571 = scalar_lea.vmem [#allocation2], %s570
          %572 = dma.done %s568, 128
        $region52: #{rand_part_forward.3} parent=47 // pred_fallthru
          _
        // Predicated region
        $region53: #{rand_part_forward.3} parent=47 // pred_check
          %p573 = pneg %p151
        $region54: #{rand_part_forward.3} parent=47 // pred_check_branch
          %575 = sbr.rel (%p573) target = $region56
        $region55: #{rand_part_forward.3} parent=47 // pred_region
          %s576 = sand.u32 %s136, 1
          %s577 = scalar_lea.sflag [#allocation5], %s576
          %s578 = sand.u32 %s136, 1
          %s579 = smul.addr %s578, 4
          %s580 = scalar_lea.vmem [#allocation4], %s579
          %581 = dma.done %s577, 64
        $region56: #{rand_part_forward.3} parent=47 // pred_fallthru
          _
        // Predicated region
        $region57: #{rand_part_forward.3} parent=47 // pred_check
          %p582 = pneg %p177
        $region58: #{rand_part_forward.3} parent=47 // pred_check_branch
          %584 = sbr.rel (%p582) target = $region60
        $region59: #{rand_part_forward.3} parent=47 // pred_region
          %p585 = scmp.lt.s32.totalorder %s24, 1
          %s586 = scalar_select %p585, %s24, 1
          %s587 = scalar_lea.vmem %s5, %s586
        $region60: #{rand_part_forward.3} parent=47 // pred_fallthru
          _
      $region48: #{rand_part_forward.3} parent=5 // pred_fallthru
        _
    $region6: #{rand_part_forward.3} parent=1 // loop_footer
      %s22 = sadd.s32 1, %s18
    $region7: #{rand_part_forward.3} parent=1 // loop_footer_branch
      %17 = sbr.rel target = $region3
    $region8: #{rand_part_forward.3} parent=1 // loop_exit
      _
    %588 = vsyncpa [#allocation3], 1
    %s589 = scalar_lea.sflag [#allocation3], 1
    %590 = vsyncpa %s589, 1
    %591 = vsyncpa [#allocation5], 1
    %s592 = scalar_lea.sflag [#allocation5], 1
    %593 = vsyncpa %s592, 1

</llo_original>
